<compile_context>
chip_gen: v6e
topology: v6e:2x2x1
jax: 0.10.0
libtpu: 0.0.40
codegen_flags: <defaults>
</compile_context>

<pallas_src>
import numpy as np
import jax
import jax.numpy as jnp
from jax import lax
from jax.experimental import pallas as pl
from jax.experimental.pallas import tpu as pltpu

N, C, H, W = 2, 8, 16, 16        # W*C == 128 -> exactly one lane tile
WC = W * C                        # 128
NH = N * H                        # 32
NHW = N * H * W                   # per-channel batch-stat count
EPS = 1e-5                        # PyTorch BatchNorm2d default
WEIGHT_DT = jnp.bfloat16          # wire/MXU dtype of folded conv weights


def _channel_sum(row):
    """(1, WC) row -> per-channel sum over the W lane-groups (stride C),
    broadcast back to every (w, c) lane.  log2(W)=4 XLU lane rolls + adds.
    (Full cyclic stride-C sum, so it is roll-direction agnostic.)"""
    for s in (C, 2 * C, 4 * C, 8 * C):
        row = row + pltpu.roll(row, shift=s, axis=1)
    return row


def resblock_kernel(x_ref, g1_ref, b1_ref, w1_ref, c1b_ref,
                    g2_ref, b2_ref, w2_ref, c2b_ref, o_ref):
    """x_ref/o_ref : (NH, WC) f32 packed activations.
    g*/b*/c*b_ref : (1, WC) lane-tiled per-channel gamma/beta/conv-bias (f32).
    w*_ref        : (3*WC, WC) folded conv weights (WEIGHT_DT)."""
    x = x_ref[...]

    # Per-image vertical (H) zero-padding masks, shared by both convolutions.
    # Rows are n-major / h-minor, so h == row % H.
    h_idx = lax.broadcasted_iota(jnp.int32, (NH, WC), 0) % H
    not_top = (h_idx != 0).astype(jnp.float32)       # rows with a valid h-1
    not_bot = (h_idx != H - 1).astype(jnp.float32)   # rows with a valid h+1
    zrow = jnp.zeros((1, WC), jnp.float32)

    def bn_relu(h, g_ref, b_ref):
        # training-mode BatchNorm2d (biased variance) + ReLU; affine folded
        # into a single scale/shift mul-add on the (1, WC) row.
        inv_cnt = 1.0 / float(NHW)
        mean = _channel_sum(jnp.sum(h, axis=0, keepdims=True)) * inv_cnt
        msq = _channel_sum(jnp.sum(h * h, axis=0, keepdims=True)) * inv_cnt
        var = jnp.maximum(msq - mean * mean, 0.0)
        scale = g_ref[...] * lax.rsqrt(var + EPS)          # (1, WC)
        shift = b_ref[...] - mean * scale                  # (1, WC)
        return jnp.maximum(h * scale + shift, 0.0)

    def conv3x3(a, w_ref, bias_ref):
        # Three ky-shifted copies of `a` (boundary rows zeroed per image),
        # lane-concatenated (each third is a whole 128-lane tile), then a
        # single (NH, 3*WC) @ (3*WC, WC) MXU matmul with f32 accumulation.
        up = not_top * jnp.concatenate([zrow, a[:-1, :]], axis=0)   # row h-1
        dn = not_bot * jnp.concatenate([a[1:, :], zrow], axis=0)    # row h+1
        slab = jnp.concatenate([up, a, dn], axis=1).astype(WEIGHT_DT)
        acc = jnp.dot(slab, w_ref[...], preferred_element_type=jnp.float32)
        return acc + bias_ref[...]

    # block = BN -> ReLU -> conv3x3 -> BN -> ReLU -> conv3x3 ; all in vregs
    a1 = bn_relu(x, g1_ref, b1_ref)
    h1 = conv3x3(a1, w1_ref, c1b_ref)
    a2 = bn_relu(h1, g2_ref, b2_ref)
    # identity shortcut folded into the single output store
    o_ref[...] = x + conv3x3(a2, w2_ref, c2b_ref)


# ----------------------------- host-side glue ------------------------------

def _fold_conv_weight(wt):
    """(Cout, Cin, 3, 3) torch-layout weight -> (3*WC, WC) folded matrix.

    folded[ky*WC + wi*C + ci, wo*C + co] = wt[co, ci, ky, wi - wo + 1]
    for |wi - wo| <= 1, zero otherwise (== zero padding along W)."""
    wt = np.asarray(wt, np.float32)
    big = np.zeros((3, WC, WC), np.float32)
    for ky in range(3):
        for kx in range(3):
            blk = wt[:, :, ky, kx].T                       # (Cin, Cout)
            for wo in range(W):
                wi = wo + kx - 1
                if 0 <= wi < W:
                    big[ky, wi * C:(wi + 1) * C, wo * C:(wo + 1) * C] = blk
    return jnp.asarray(big.reshape(3 * WC, WC), WEIGHT_DT)


def _lane_tile(v):
    """(C,) per-channel vector -> (1, WC) lane-tiled row (w-major, c-minor)."""
    return jnp.asarray(np.tile(np.asarray(v, np.float32), W)[None, :])


def prepare_params(params):
    """One-time host-side folding of the module parameters."""
    return dict(
        g1=_lane_tile(params['gamma1']), b1=_lane_tile(params['beta1']),
        w1=_fold_conv_weight(params['w1']), c1b=_lane_tile(params['b1']),
        g2=_lane_tile(params['gamma2']), b2=_lane_tile(params['beta2']),
        w2=_fold_conv_weight(params['w2']), c2b=_lane_tile(params['b2']),
    )


@jax.jit
def resblock_pallas(x_nchw, p):
    x2d = jnp.transpose(x_nchw.astype(jnp.float32), (0, 2, 3, 1)).reshape(NH, WC)
    vm = pl.BlockSpec(memory_space=pltpu.MemorySpace.VMEM)
    out = pl.pallas_call(
        resblock_kernel,
        out_shape=jax.ShapeDtypeStruct((NH, WC), jnp.float32),
        in_specs=[vm] * 9,
        out_specs=vm,
    )(x2d, p['g1'], p['b1'], p['w1'], p['c1b'],
      p['g2'], p['b2'], p['w2'], p['c2b'])
    return jnp.transpose(out.reshape(N, H, W, C), (0, 3, 1, 2))


def resblock_ref(x, params):
    """Pure-JAX f32 reference matching the PyTorch forward (training-mode BN)."""
    def bn(h, g, b):
        mean = jnp.mean(h, axis=(0, 2, 3), keepdims=True)
        msq = jnp.mean(h * h, axis=(0, 2, 3), keepdims=True)
        var = msq - mean * mean
        return ((h - mean) * lax.rsqrt(var + EPS) * g[None, :, None, None]
                + b[None, :, None, None])

    def conv(h, w, b):
        y = lax.conv_general_dilated(h, w, (1, 1), ((1, 1), (1, 1)),
                                     dimension_numbers=('NCHW', 'OIHW', 'NCHW'))
        return y + b[None, :, None, None]

    h = jnp.maximum(bn(x, params['gamma1'], params['beta1']), 0.0)
    h = conv(h, params['w1'], params['b1'])
    h = jnp.maximum(bn(h, params['gamma2'], params['beta2']), 0.0)
    h = conv(h, params['w2'], params['b2'])
    return x + h


if __name__ == "__main__":
    key = jax.random.PRNGKey(0)
    ks = jax.random.split(key, 9)
    x = jax.random.normal(ks[0], (N, C, H, W), jnp.float32)
    params = {
        'w1': 0.1 * jax.random.normal(ks[1], (C, C, 3, 3), jnp.float32),
        'b1': 0.1 * jax.random.normal(ks[2], (C,), jnp.float32),
        'w2': 0.1 * jax.random.normal(ks[3], (C, C, 3, 3), jnp.float32),
        'b2': 0.1 * jax.random.normal(ks[4], (C,), jnp.float32),
        'gamma1': 1.0 + 0.1 * jax.random.normal(ks[5], (C,), jnp.float32),
        'beta1': 0.1 * jax.random.normal(ks[6], (C,), jnp.float32),
        'gamma2': 1.0 + 0.1 * jax.random.normal(ks[7], (C,), jnp.float32),
        'beta2': 0.1 * jax.random.normal(ks[8], (C,), jnp.float32),
    }

    prepped = prepare_params(params)       # host-side constant folding, once
    out = resblock_pallas(x, prepped)
    jax.block_until_ready(out)

    ref = resblock_ref(x, params)
    err = float(jnp.max(jnp.abs(out - ref)))
    # With bf16 weights + bf16 matmul inputs the max-abs deviation from the
    # exact-f32 reference is ~3e-3 at these scales; 3e-2 gives ~10x headroom.
    # Flipping WEIGHT_DT to float32 restores the near-exact path (tol 1e-3).
    tol = 1e-3 if WEIGHT_DT == jnp.float32 else 3e-2
    assert out.shape == (N, C, H, W), out.shape
    assert err < tol, f"max abs error vs reference: {err} (tol {tol})"
    print("KERNEL_OK")
</pallas_src>

<mosaic_0001>
module attributes {stable_mosaic.version = 11 : i64} {
  func.func @resblock_kernel(%arg0: memref<32x128xf32, #tpu.memory_space<vmem>>, %arg1: memref<1x128xf32, #tpu.memory_space<vmem>>, %arg2: memref<1x128xf32, #tpu.memory_space<vmem>>, %arg3: memref<384x128xbf16, #tpu.memory_space<vmem>>, %arg4: memref<1x128xf32, #tpu.memory_space<vmem>>, %arg5: memref<1x128xf32, #tpu.memory_space<vmem>>, %arg6: memref<1x128xf32, #tpu.memory_space<vmem>>, %arg7: memref<384x128xbf16, #tpu.memory_space<vmem>>, %arg8: memref<1x128xf32, #tpu.memory_space<vmem>>, %arg9: memref<32x128xf32, #tpu.memory_space<vmem>>) attributes {dimension_semantics = [], scalar_prefetch = 0 : i64, scratch_operands = 0 : i64, tpu.core_type = #tpu.core_type<tc>} {
    %c0 = arith.constant 0 : index
    %c0_0 = arith.constant 0 : index
    %0 = vector.load %arg0[%c0, %c0_0] : memref<32x128xf32, #tpu.memory_space<vmem>>, vector<32x128xf32>
    %1 = tpu.iota {dimensions = array<i32: 0>} : vector<32x128xi32>
    %c16_i32 = arith.constant 16 : i32
    %c0_i32 = arith.constant 0 : i32
    %2 = arith.cmpi eq, %c16_i32, %c0_i32 : i32
    %c1_i32 = arith.constant 1 : i32
    %3 = arith.select %2, %c1_i32, %c16_i32 : i32
    %4 = vector.broadcast %3 : i32 to vector<32x128xi32>
    %5 = arith.remsi %1, %4 : vector<32x128xi32>
    %c0_i32_1 = arith.constant 0 : i32
    %6 = vector.broadcast %c0_i32_1 : i32 to vector<32x128xi32>
    %7 = arith.cmpi ne, %5, %6 : vector<32x128xi32>
    %c0_i32_2 = arith.constant 0 : i32
    %8 = vector.broadcast %c0_i32_2 : i32 to vector<32x128xi32>
    %9 = arith.cmpi slt, %5, %8 : vector<32x128xi32>
    %c0_i32_3 = arith.constant 0 : i32
    %10 = arith.cmpi slt, %3, %c0_i32_3 : i32
    %11 = vector.broadcast %10 : i1 to vector<32x128xi1>
    %12 = vector.broadcast %11 : vector<32x128xi1> to vector<32x128xi1>
    %13 = arith.xori %9, %12 : vector<32x128xi1>
    %14 = arith.andi %13, %7 : vector<32x128xi1>
    %15 = vector.broadcast %3 : i32 to vector<32x128xi32>
    %16 = arith.addi %5, %15 : vector<32x128xi32>
    %17 = arith.select %14, %16, %5 : vector<32x128xi1>, vector<32x128xi32>
    %c0_i32_4 = arith.constant 0 : i32
    %18 = vector.broadcast %c0_i32_4 : i32 to vector<32x128xi32>
    %19 = arith.cmpi ne, %17, %18 : vector<32x128xi32>
    %20 = arith.extui %19 : vector<32x128xi1> to vector<32x128xi32>
    %21 = arith.sitofp %20 : vector<32x128xi32> to vector<32x128xf32>
    %c15_i32 = arith.constant 15 : i32
    %22 = vector.broadcast %c15_i32 : i32 to vector<32x128xi32>
    %23 = arith.cmpi ne, %17, %22 : vector<32x128xi32>
    %24 = arith.extui %23 : vector<32x128xi1> to vector<32x128xi32>
    %25 = arith.sitofp %24 : vector<32x128xi32> to vector<32x128xf32>
    %cst = arith.constant 0.000000e+00 : f32
    %26 = vector.broadcast %cst : f32 to vector<1x128xf32>
    %cst_5 = arith.constant dense<0.000000e+00> : vector<128xf32>
    %27 = vector.multi_reduction <add>, %0, %cst_5 [0] : vector<32x128xf32> to vector<128xf32>
    %28 = vector.shape_cast %27 : vector<128xf32> to vector<1x128xf32>
    %c8_i32 = arith.constant 8 : i32
    %29 = tpu.dynamic_rotate %28 by %c8_i32 dim 1 : vector<1x128xf32>, i32 -> vector<1x128xf32>
    %30 = arith.addf %28, %29 : vector<1x128xf32>
    %c16_i32_6 = arith.constant 16 : i32
    %31 = tpu.dynamic_rotate %30 by %c16_i32_6 dim 1 : vector<1x128xf32>, i32 -> vector<1x128xf32>
    %32 = arith.addf %30, %31 : vector<1x128xf32>
    %c32_i32 = arith.constant 32 : i32
    %33 = tpu.dynamic_rotate %32 by %c32_i32 dim 1 : vector<1x128xf32>, i32 -> vector<1x128xf32>
    %34 = arith.addf %32, %33 : vector<1x128xf32>
    %c64_i32 = arith.constant 64 : i32
    %35 = tpu.dynamic_rotate %34 by %c64_i32 dim 1 : vector<1x128xf32>, i32 -> vector<1x128xf32>
    %36 = arith.addf %34, %35 : vector<1x128xf32>
    %cst_7 = arith.constant 0.001953125 : f32
    %37 = vector.broadcast %cst_7 : f32 to vector<1x128xf32>
    %38 = arith.mulf %36, %37 : vector<1x128xf32>
    %39 = arith.mulf %0, %0 : vector<32x128xf32>
    %cst_8 = arith.constant dense<0.000000e+00> : vector<128xf32>
    %40 = vector.multi_reduction <add>, %39, %cst_8 [0] : vector<32x128xf32> to vector<128xf32>
    %41 = vector.shape_cast %40 : vector<128xf32> to vector<1x128xf32>
    %c8_i32_9 = arith.constant 8 : i32
    %42 = tpu.dynamic_rotate %41 by %c8_i32_9 dim 1 : vector<1x128xf32>, i32 -> vector<1x128xf32>
    %43 = arith.addf %41, %42 : vector<1x128xf32>
    %c16_i32_10 = arith.constant 16 : i32
    %44 = tpu.dynamic_rotate %43 by %c16_i32_10 dim 1 : vector<1x128xf32>, i32 -> vector<1x128xf32>
    %45 = arith.addf %43, %44 : vector<1x128xf32>
    %c32_i32_11 = arith.constant 32 : i32
    %46 = tpu.dynamic_rotate %45 by %c32_i32_11 dim 1 : vector<1x128xf32>, i32 -> vector<1x128xf32>
    %47 = arith.addf %45, %46 : vector<1x128xf32>
    %c64_i32_12 = arith.constant 64 : i32
    %48 = tpu.dynamic_rotate %47 by %c64_i32_12 dim 1 : vector<1x128xf32>, i32 -> vector<1x128xf32>
    %49 = arith.addf %47, %48 : vector<1x128xf32>
    %cst_13 = arith.constant 0.001953125 : f32
    %50 = vector.broadcast %cst_13 : f32 to vector<1x128xf32>
    %51 = arith.mulf %49, %50 : vector<1x128xf32>
    %52 = arith.mulf %38, %38 : vector<1x128xf32>
    %53 = arith.subf %51, %52 : vector<1x128xf32>
    %cst_14 = arith.constant 0.000000e+00 : f32
    %54 = vector.broadcast %cst_14 : f32 to vector<1x128xf32>
    %55 = arith.maximumf %53, %54 : vector<1x128xf32>
    %c0_15 = arith.constant 0 : index
    %c0_16 = arith.constant 0 : index
    %56 = vector.load %arg1[%c0_15, %c0_16] : memref<1x128xf32, #tpu.memory_space<vmem>>, vector<1x128xf32>
    %cst_17 = arith.constant 9.99999974E-6 : f32
    %57 = vector.broadcast %cst_17 : f32 to vector<1x128xf32>
    %58 = arith.addf %55, %57 : vector<1x128xf32>
    %59 = math.rsqrt %58 : vector<1x128xf32>
    %60 = arith.mulf %56, %59 : vector<1x128xf32>
    %c0_18 = arith.constant 0 : index
    %c0_19 = arith.constant 0 : index
    %61 = vector.load %arg2[%c0_18, %c0_19] : memref<1x128xf32, #tpu.memory_space<vmem>>, vector<1x128xf32>
    %62 = arith.mulf %38, %60 : vector<1x128xf32>
    %63 = arith.subf %61, %62 : vector<1x128xf32>
    %64 = vector.broadcast %60 : vector<1x128xf32> to vector<32x128xf32>
    %65 = arith.mulf %0, %64 : vector<32x128xf32>
    %66 = vector.broadcast %63 : vector<1x128xf32> to vector<32x128xf32>
    %67 = arith.addf %65, %66 : vector<32x128xf32>
    %cst_20 = arith.constant 0.000000e+00 : f32
    %68 = vector.broadcast %cst_20 : f32 to vector<32x128xf32>
    %69 = arith.maximumf %67, %68 : vector<32x128xf32>
    %70 = vector.extract_strided_slice %69 {offsets = [0, 0], sizes = [31, 128], strides = [1, 1]} : vector<32x128xf32> to vector<31x128xf32>
    %71 = tpu.concatenate %26, %70 in 0 : vector<1x128xf32>, vector<31x128xf32> -> vector<32x128xf32>
    %72 = arith.mulf %21, %71 : vector<32x128xf32>
    %73 = vector.extract_strided_slice %69 {offsets = [1, 0], sizes = [31, 128], strides = [1, 1]} : vector<32x128xf32> to vector<31x128xf32>
    %74 = tpu.concatenate %73, %26 in 0 : vector<31x128xf32>, vector<1x128xf32> -> vector<32x128xf32>
    %75 = arith.mulf %25, %74 : vector<32x128xf32>
    %76 = tpu.concatenate %72, %69, %75 in 1 : vector<32x128xf32>, vector<32x128xf32>, vector<32x128xf32> -> vector<32x384xf32>
    %77 = arith.truncf %76 : vector<32x384xf32> to vector<32x384xbf16>
    %c0_21 = arith.constant 0 : index
    %c0_22 = arith.constant 0 : index
    %78 = vector.load %arg3[%c0_21, %c0_22] : memref<384x128xbf16, #tpu.memory_space<vmem>>, vector<384x128xbf16>
    %cst_23 = arith.constant dense<0.000000e+00> : vector<32x128xf32>
    %79 = tpu.matmul %77, %78, %cst_23 {dimension_numbers = #tpu.dot_dimension_numbers<[1], [0], [0], [1], [0, 0, 1, 1], [], []>} : vector<32x384xbf16>, vector<384x128xbf16>, vector<32x128xf32> -> vector<32x128xf32>
    %c0_24 = arith.constant 0 : index
    %c0_25 = arith.constant 0 : index
    %80 = vector.load %arg4[%c0_24, %c0_25] : memref<1x128xf32, #tpu.memory_space<vmem>>, vector<1x128xf32>
    %81 = vector.broadcast %80 : vector<1x128xf32> to vector<32x128xf32>
    %82 = arith.addf %79, %81 : vector<32x128xf32>
    %cst_26 = arith.constant dense<0.000000e+00> : vector<128xf32>
    %83 = vector.multi_reduction <add>, %82, %cst_26 [0] : vector<32x128xf32> to vector<128xf32>
    %84 = vector.shape_cast %83 : vector<128xf32> to vector<1x128xf32>
    %c8_i32_27 = arith.constant 8 : i32
    %85 = tpu.dynamic_rotate %84 by %c8_i32_27 dim 1 : vector<1x128xf32>, i32 -> vector<1x128xf32>
    %86 = arith.addf %84, %85 : vector<1x128xf32>
    %c16_i32_28 = arith.constant 16 : i32
    %87 = tpu.dynamic_rotate %86 by %c16_i32_28 dim 1 : vector<1x128xf32>, i32 -> vector<1x128xf32>
    %88 = arith.addf %86, %87 : vector<1x128xf32>
    %c32_i32_29 = arith.constant 32 : i32
    %89 = tpu.dynamic_rotate %88 by %c32_i32_29 dim 1 : vector<1x128xf32>, i32 -> vector<1x128xf32>
    %90 = arith.addf %88, %89 : vector<1x128xf32>
    %c64_i32_30 = arith.constant 64 : i32
    %91 = tpu.dynamic_rotate %90 by %c64_i32_30 dim 1 : vector<1x128xf32>, i32 -> vector<1x128xf32>
    %92 = arith.addf %90, %91 : vector<1x128xf32>
    %cst_31 = arith.constant 0.001953125 : f32
    %93 = vector.broadcast %cst_31 : f32 to vector<1x128xf32>
    %94 = arith.mulf %92, %93 : vector<1x128xf32>
    %95 = arith.mulf %82, %82 : vector<32x128xf32>
    %cst_32 = arith.constant dense<0.000000e+00> : vector<128xf32>
    %96 = vector.multi_reduction <add>, %95, %cst_32 [0] : vector<32x128xf32> to vector<128xf32>
    %97 = vector.shape_cast %96 : vector<128xf32> to vector<1x128xf32>
    %c8_i32_33 = arith.constant 8 : i32
    %98 = tpu.dynamic_rotate %97 by %c8_i32_33 dim 1 : vector<1x128xf32>, i32 -> vector<1x128xf32>
    %99 = arith.addf %97, %98 : vector<1x128xf32>
    %c16_i32_34 = arith.constant 16 : i32
    %100 = tpu.dynamic_rotate %99 by %c16_i32_34 dim 1 : vector<1x128xf32>, i32 -> vector<1x128xf32>
    %101 = arith.addf %99, %100 : vector<1x128xf32>
    %c32_i32_35 = arith.constant 32 : i32
    %102 = tpu.dynamic_rotate %101 by %c32_i32_35 dim 1 : vector<1x128xf32>, i32 -> vector<1x128xf32>
    %103 = arith.addf %101, %102 : vector<1x128xf32>
    %c64_i32_36 = arith.constant 64 : i32
    %104 = tpu.dynamic_rotate %103 by %c64_i32_36 dim 1 : vector<1x128xf32>, i32 -> vector<1x128xf32>
    %105 = arith.addf %103, %104 : vector<1x128xf32>
    %cst_37 = arith.constant 0.001953125 : f32
    %106 = vector.broadcast %cst_37 : f32 to vector<1x128xf32>
    %107 = arith.mulf %105, %106 : vector<1x128xf32>
    %108 = arith.mulf %94, %94 : vector<1x128xf32>
    %109 = arith.subf %107, %108 : vector<1x128xf32>
    %cst_38 = arith.constant 0.000000e+00 : f32
    %110 = vector.broadcast %cst_38 : f32 to vector<1x128xf32>
    %111 = arith.maximumf %109, %110 : vector<1x128xf32>
    %c0_39 = arith.constant 0 : index
    %c0_40 = arith.constant 0 : index
    %112 = vector.load %arg5[%c0_39, %c0_40] : memref<1x128xf32, #tpu.memory_space<vmem>>, vector<1x128xf32>
    %cst_41 = arith.constant 9.99999974E-6 : f32
    %113 = vector.broadcast %cst_41 : f32 to vector<1x128xf32>
    %114 = arith.addf %111, %113 : vector<1x128xf32>
    %115 = math.rsqrt %114 : vector<1x128xf32>
    %116 = arith.mulf %112, %115 : vector<1x128xf32>
    %c0_42 = arith.constant 0 : index
    %c0_43 = arith.constant 0 : index
    %117 = vector.load %arg6[%c0_42, %c0_43] : memref<1x128xf32, #tpu.memory_space<vmem>>, vector<1x128xf32>
    %118 = arith.mulf %94, %116 : vector<1x128xf32>
    %119 = arith.subf %117, %118 : vector<1x128xf32>
    %120 = vector.broadcast %116 : vector<1x128xf32> to vector<32x128xf32>
    %121 = arith.mulf %82, %120 : vector<32x128xf32>
    %122 = vector.broadcast %119 : vector<1x128xf32> to vector<32x128xf32>
    %123 = arith.addf %121, %122 : vector<32x128xf32>
    %cst_44 = arith.constant 0.000000e+00 : f32
    %124 = vector.broadcast %cst_44 : f32 to vector<32x128xf32>
    %125 = arith.maximumf %123, %124 : vector<32x128xf32>
    %126 = vector.extract_strided_slice %125 {offsets = [0, 0], sizes = [31, 128], strides = [1, 1]} : vector<32x128xf32> to vector<31x128xf32>
    %127 = tpu.concatenate %26, %126 in 0 : vector<1x128xf32>, vector<31x128xf32> -> vector<32x128xf32>
    %128 = arith.mulf %21, %127 : vector<32x128xf32>
    %129 = vector.extract_strided_slice %125 {offsets = [1, 0], sizes = [31, 128], strides = [1, 1]} : vector<32x128xf32> to vector<31x128xf32>
    %130 = tpu.concatenate %129, %26 in 0 : vector<31x128xf32>, vector<1x128xf32> -> vector<32x128xf32>
    %131 = arith.mulf %25, %130 : vector<32x128xf32>
    %132 = tpu.concatenate %128, %125, %131 in 1 : vector<32x128xf32>, vector<32x128xf32>, vector<32x128xf32> -> vector<32x384xf32>
    %133 = arith.truncf %132 : vector<32x384xf32> to vector<32x384xbf16>
    %c0_45 = arith.constant 0 : index
    %c0_46 = arith.constant 0 : index
    %134 = vector.load %arg7[%c0_45, %c0_46] : memref<384x128xbf16, #tpu.memory_space<vmem>>, vector<384x128xbf16>
    %cst_47 = arith.constant dense<0.000000e+00> : vector<32x128xf32>
    %135 = tpu.matmul %133, %134, %cst_47 {dimension_numbers = #tpu.dot_dimension_numbers<[1], [0], [0], [1], [0, 0, 1, 1], [], []>} : vector<32x384xbf16>, vector<384x128xbf16>, vector<32x128xf32> -> vector<32x128xf32>
    %c0_48 = arith.constant 0 : index
    %c0_49 = arith.constant 0 : index
    %136 = vector.load %arg8[%c0_48, %c0_49] : memref<1x128xf32, #tpu.memory_space<vmem>>, vector<1x128xf32>
    %137 = vector.broadcast %136 : vector<1x128xf32> to vector<32x128xf32>
    %138 = arith.addf %135, %137 : vector<32x128xf32>
    %139 = arith.addf %0, %138 : vector<32x128xf32>
    %c0_50 = arith.constant 0 : index
    %c0_51 = arith.constant 0 : index
    %140 = vector.load %arg9[%c0_50, %c0_51] : memref<32x128xf32, #tpu.memory_space<vmem>>, vector<32x128xf32>
    tpu.vector_store %arg9[%c0_50, %c0_51], %139 {strides = array<i32>} : memref<32x128xf32, #tpu.memory_space<vmem>>, vector<32x128xf32>,
    return
  }
}

</mosaic_0001>

<llo_original>
// kernel: resblock_pallas.1
$region0: #{resblock_pallas.1}
  #allocation0 [shape = 'u32[]', space=smem, size = 0x4, offset = 0x4, fixed_abs, tag = 'smem constant byte address 0x4 - core index']
  #allocation1 [shape = 'u32[144,128]{1,0:T(1,128)}', space=vmem, size = 0x12000, scoped, tag = 'internal scratch']
  %s0 = inlined_call_operand.vmem [shape: f32[32,128], index: 0, kind: input, shape index: {}]
  %s1 = inlined_call_operand.vmem [shape: f32[1,128], index: 1, kind: input, shape index: {}]
  %s2 = inlined_call_operand.vmem [shape: f32[1,128], index: 2, kind: input, shape index: {}]
  %s3 = inlined_call_operand.vmem [shape: bf16[384,128], index: 3, kind: input, shape index: {}]
  %s4 = inlined_call_operand.vmem [shape: f32[1,128], index: 4, kind: input, shape index: {}]
  %s5 = inlined_call_operand.vmem [shape: f32[1,128], index: 5, kind: input, shape index: {}]
  %s6 = inlined_call_operand.vmem [shape: f32[1,128], index: 6, kind: input, shape index: {}]
  %s7 = inlined_call_operand.vmem [shape: bf16[384,128], index: 7, kind: input, shape index: {}]
  %s8 = inlined_call_operand.vmem [shape: f32[1,128], index: 8, kind: input, shape index: {}]
  %s9 = inlined_call_operand.vmem [shape: f32[32,128], index: 9, kind: output, shape index: {}]
  %s10 = sld [smem:[#allocation0]]
  $region46: #{resblock_pallas.1} parent=0
    _
  %s12 = ssub.s32 1, %s10
  %s13 = scalar_select 0, %s12, %s10
  // Predicated region
  $region2: #{resblock_pallas.1} parent=0 // pred_check
    _
  $region3: #{resblock_pallas.1} parent=0 // pred_check_branch
    %15 = sbr.rel (0) target = $region5
  $region4: #{resblock_pallas.1} parent=0 // pred_region
    _
  $region5: #{resblock_pallas.1} parent=0 // pred_fallthru
    _
  // Predicated region
  $region6: #{resblock_pallas.1} parent=0 // pred_check
    _
  $region7: #{resblock_pallas.1} parent=0 // pred_check_branch
    %17 = sbr.rel (0) target = $region9
  $region8: #{resblock_pallas.1} parent=0 // pred_region
    _
  $region9: #{resblock_pallas.1} parent=0 // pred_fallthru
    _
  // Predicated region
  $region10: #{resblock_pallas.1} parent=0 // pred_check
    _
  $region11: #{resblock_pallas.1} parent=0 // pred_check_branch
    %19 = sbr.rel (0) target = $region13
  $region12: #{resblock_pallas.1} parent=0 // pred_region
    _
  $region13: #{resblock_pallas.1} parent=0 // pred_fallthru
    _
  // Predicated region
  $region14: #{resblock_pallas.1} parent=0 // pred_check
    _
  $region15: #{resblock_pallas.1} parent=0 // pred_check_branch
    %21 = sbr.rel (0) target = $region17
  $region16: #{resblock_pallas.1} parent=0 // pred_region
    _
  $region17: #{resblock_pallas.1} parent=0 // pred_fallthru
    _
  // Predicated region
  $region18: #{resblock_pallas.1} parent=0 // pred_check
    _
  $region19: #{resblock_pallas.1} parent=0 // pred_check_branch
    %23 = sbr.rel (0) target = $region21
  $region20: #{resblock_pallas.1} parent=0 // pred_region
    _
  $region21: #{resblock_pallas.1} parent=0 // pred_fallthru
    _
  // Predicated region
  $region22: #{resblock_pallas.1} parent=0 // pred_check
    _
  $region23: #{resblock_pallas.1} parent=0 // pred_check_branch
    %25 = sbr.rel (0) target = $region25
  $region24: #{resblock_pallas.1} parent=0 // pred_region
    _
  $region25: #{resblock_pallas.1} parent=0 // pred_fallthru
    _
  // Predicated region
  $region26: #{resblock_pallas.1} parent=0 // pred_check
    _
  $region27: #{resblock_pallas.1} parent=0 // pred_check_branch
    %27 = sbr.rel (0) target = $region29
  $region28: #{resblock_pallas.1} parent=0 // pred_region
    _
  $region29: #{resblock_pallas.1} parent=0 // pred_fallthru
    _
  // Predicated region
  $region30: #{resblock_pallas.1} parent=0 // pred_check
    _
  $region31: #{resblock_pallas.1} parent=0 // pred_check_branch
    %29 = sbr.rel (0) target = $region33
  $region32: #{resblock_pallas.1} parent=0 // pred_region
    _
  $region33: #{resblock_pallas.1} parent=0 // pred_fallthru
    _
  // Predicated region
  $region34: #{resblock_pallas.1} parent=0 // pred_check
    _
  $region35: #{resblock_pallas.1} parent=0 // pred_check_branch
    %31 = sbr.rel (0) target = $region37
  $region36: #{resblock_pallas.1} parent=0 // pred_region
    _
  $region37: #{resblock_pallas.1} parent=0 // pred_fallthru
    _
  %v33 = vld [vmem:[%s0] sm:$0xff]
  %v34 = vld [vmem:[%s0 + $0x8] sm:$0xff]
  %v35 = vld [vmem:[%s0 + $0x10] sm:$0xff]
  %v36 = vld [vmem:[%s0 + $0x18] sm:$0xff]
  %v37 = vlaneseq
  %v38 = vshrl.u32 %v37, 7
  %v39 = vadd.s32 %v38, 8
  %v40 = vadd.s32 %v38, 16
  %v41 = vadd.s32 %v38, 24
  %vm42 = vcmp.lt.s32.totalorder %v38, 0
  %v43 = vsub.s32 0, %v38
  %v44 = vsel %vm42, %v43, %v38
  %v45 = vshrl.u32 %v44, 4
  %v46 = vand.u32 %v44, 15
  %v47 = vsub.s32 0, %v46
  %v48 = vsel %vm42, %v47, %v46
  %vm49 = vcmp.lt.s32.totalorder %v39, 0
  %v50 = vsub.s32 0, %v39
  %v51 = vsel %vm49, %v50, %v39
  %v52 = vshrl.u32 %v51, 4
  %v53 = vand.u32 %v51, 15
  %v54 = vsub.s32 0, %v53
  %v55 = vsel %vm49, %v54, %v53
  %vm56 = vcmp.lt.s32.totalorder %v40, 0
  %v57 = vsub.s32 0, %v40
  %v58 = vsel %vm56, %v57, %v40
  %v59 = vshrl.u32 %v58, 4
  %v60 = vand.u32 %v58, 15
  %v61 = vsub.s32 0, %v60
  %v62 = vsel %vm56, %v61, %v60
  %vm63 = vcmp.lt.s32.totalorder %v41, 0
  %v64 = vsub.s32 0, %v41
  %v65 = vsel %vm63, %v64, %v41
  %v66 = vshrl.u32 %v65, 4
  %v67 = vand.u32 %v65, 15
  %v68 = vsub.s32 0, %v67
  %v69 = vsel %vm63, %v68, %v67
  %vm70 = vcmp.ne.s32.totalorder %v48, 0
  %vm71 = vcmp.ne.s32.totalorder %v55, 0
  %vm72 = vcmp.ne.s32.totalorder %v62, 0
  %vm73 = vcmp.ne.s32.totalorder %v69, 0
  %vm74 = vcmp.lt.s32.totalorder %v48, 0
  %vm75 = vcmp.lt.s32.totalorder %v55, 0
  %vm76 = vcmp.lt.s32.totalorder %v62, 0
  %vm77 = vcmp.lt.s32.totalorder %v69, 0
  %vm78 = vmand %vm74, %vm70
  %vm79 = vmand %vm75, %vm71
  %vm80 = vmand %vm76, %vm72
  %vm81 = vmand %vm77, %vm73
  %v82 = vadd.s32 %v48, 16
  %v83 = vadd.s32 %v55, 16
  %v84 = vadd.s32 %v62, 16
  %v85 = vadd.s32 %v69, 16
  %v86 = vsel %vm78, %v82, %v48
  %v87 = vsel %vm79, %v83, %v55
  %v88 = vsel %vm80, %v84, %v62
  %v89 = vsel %vm81, %v85, %v69
  %vm90 = vcmp.ne.s32.totalorder %v86, 0
  %vm91 = vcmp.ne.s32.totalorder %v87, 0
  %vm92 = vcmp.ne.s32.totalorder %v88, 0
  %vm93 = vcmp.ne.s32.totalorder %v89, 0
  %v94 = vsel %vm90, 1, 0
  %v95 = vsel %vm91, 1, 0
  %v96 = vsel %vm92, 1, 0
  %v97 = vsel %vm93, 1, 0
  %v98 = vcvt.s32.f32 %v94
  %v99 = vcvt.s32.f32 %v95
  %v100 = vcvt.s32.f32 %v96
  %v101 = vcvt.s32.f32 %v97
  %vm102 = vcmp.ne.s32.totalorder %v86, 15
  %vm103 = vcmp.ne.s32.totalorder %v87, 15
  %vm104 = vcmp.ne.s32.totalorder %v88, 15
  %vm105 = vcmp.ne.s32.totalorder %v89, 15
  %v106 = vsel %vm102, 1, 0
  %v107 = vsel %vm103, 1, 0
  %v108 = vsel %vm104, 1, 0
  %v109 = vsel %vm105, 1, 0
  %v110 = vcvt.s32.f32 %v106
  %v111 = vcvt.s32.f32 %v107
  %v112 = vcvt.s32.f32 %v108
  %v113 = vcvt.s32.f32 %v109
  %v114 = vadd.f32 %v33, %v34
  %v115 = vadd.f32 %v114, %v35
  %v116 = vadd.f32 %v115, %v36
  %v117 = vrot.slane %v116, 4
  %v118 = vadd.f32 %v116, %v117
  %v119 = vrot.slane %v118, 2
  %v120 = vadd.f32 %v118, %v119
  %v121 = vrot.slane %v120, 1
  %v122 = vadd.f32 %v120, %v121
  %123 = vrot.lane.b32.xlu0 %v122, 8
  %v124 = vpop.permute.xlu0 %123
  %v125 = vadd.f32 %v122, %v124
  %126 = vrot.lane.b32.xlu0 %v125, 16
  %v127 = vpop.permute.xlu0 %126
  %v128 = vadd.f32 %v125, %v127
  %129 = vrot.lane.b32.xlu0 %v128, 32
  %v130 = vpop.permute.xlu0 %129
  %v131 = vadd.f32 %v128, %v130
  %132 = vrot.lane.b32.xlu0 %v131, 64
  %v133 = vpop.permute.xlu0 %132
  %v134 = vadd.f32 %v131, %v133
  %v135 = vmul.f32 %v134, 0.001953125
  %v136 = vmul.f32 %v33, %v33
  %v137 = vmul.f32 %v34, %v34
  %v138 = vmul.f32 %v35, %v35
  %v139 = vmul.f32 %v36, %v36
  %v140 = vadd.f32 %v136, %v137
  %v141 = vadd.f32 %v140, %v138
  %v142 = vadd.f32 %v141, %v139
  %v143 = vrot.slane %v142, 4
  %v144 = vadd.f32 %v142, %v143
  %v145 = vrot.slane %v144, 2
  %v146 = vadd.f32 %v144, %v145
  %v147 = vrot.slane %v146, 1
  %v148 = vadd.f32 %v146, %v147
  %149 = vrot.lane.b32.xlu0 %v148, 8
  %v150 = vpop.permute.xlu0 %149
  %v151 = vadd.f32 %v148, %v150
  %152 = vrot.lane.b32.xlu0 %v151, 16
  %v153 = vpop.permute.xlu0 %152
  %v154 = vadd.f32 %v151, %v153
  %155 = vrot.lane.b32.xlu0 %v154, 32
  %v156 = vpop.permute.xlu0 %155
  %v157 = vadd.f32 %v154, %v156
  %158 = vrot.lane.b32.xlu0 %v157, 64
  %v159 = vpop.permute.xlu0 %158
  %v160 = vadd.f32 %v157, %v159
  %v161 = vmul.f32 %v160, 0.001953125
  %v162 = vmul.f32 %v135, %v135
  %v163 = vsub.f32 %v161, %v162
  %v164 = vmax.f32 %v163, 0.0
  %v165 = vld [vmem:[%s1] sm:$0x1]
  %v166 = vadd.f32 %v164, 1e-05
  %v167 = vrsqrt.pop %v166
  %v168 = vmul.f32 %v165, %v167
  %v169 = vld [vmem:[%s2] sm:$0x1]
  %v170 = vmul.f32 %v135, %v168
  %v171 = vsub.f32 %v169, %v170
  %v173 = vlaneseq
  %v174 = vshrl.u32 %v173, 7
  %v175 = vsub.s32 0, %v174
  %v176 = vrot.slane %v168, %v175
  %v178 = vmul.f32 %v33, %v176
  %v179 = vmul.f32 %v34, %v176
  %v180 = vmul.f32 %v35, %v176
  %v181 = vmul.f32 %v36, %v176
  %v183 = vlaneseq
  %v184 = vshrl.u32 %v183, 7
  %v185 = vsub.s32 0, %v184
  %v186 = vrot.slane %v171, %v185
  %v188 = vadd.f32 %v178, %v186
  %v189 = vadd.f32 %v179, %v186
  %v190 = vadd.f32 %v180, %v186
  %v191 = vadd.f32 %v181, %v186
  %v192 = vmax.f32 %v188, 0.0
  %v193 = vmax.f32 %v189, 0.0
  %v194 = vmax.f32 %v190, 0.0
  %v195 = vmax.f32 %v191, 0.0
  %vm200 = vcmask 1040384
  %v201 = vrot.slane %v192, 7
  %v202 = vrot.slane %v193, 7
  %v203 = vsel %vm200, %v201, %v202
  %v204 = vrot.slane %v194, 7
  %v205 = vsel %vm200, %v202, %v204
  %v206 = vrot.slane %v195, 7
  %v207 = vsel %vm200, %v204, %v206
  %v212 = vsel %vm200, 0.0, %v201
  %v213 = vmul.f32 %v98, %v212
  %v214 = vmul.f32 %v99, %v203
  %v215 = vmul.f32 %v100, %v205
  %v216 = vmul.f32 %v101, %v207
  %vm217 = vcmask 1046528
  %v218 = vrot.slane %v192, 1
  %v219 = vrot.slane %v193, 1
  %v220 = vsel %vm217, %v218, %v219
  %v221 = vrot.slane %v194, 1
  %v222 = vsel %vm217, %v219, %v221
  %v223 = vrot.slane %v195, 1
  %v224 = vsel %vm217, %v221, %v223
  %v229 = vsel %vm217, %v223, 0.0
  %v230 = vmul.f32 %v110, %v220
  %v231 = vmul.f32 %v111, %v222
  %v232 = vmul.f32 %v112, %v224
  %v233 = vmul.f32 %v113, %v229
  %v234 = vpack.c.bf16 %v214, %v213
  %v235 = vpack.c.bf16 %v193, %v192
  %v236 = vpack.c.bf16 %v231, %v230
  %v237 = vpack.c.bf16 %v216, %v215
  %v238 = vpack.c.bf16 %v195, %v194
  %v239 = vpack.c.bf16 %v233, %v232
  %v240 = vld [vmem:[%s3] sm:$0xf]
  %v241 = vld [vmem:[%s3 + $0x4] sm:$0xf]
  %v242 = vld [vmem:[%s3 + $0x8] sm:$0xf]
  %v243 = vld [vmem:[%s3 + $0xc] sm:$0xf]
  %v244 = vld [vmem:[%s3 + $0x10] sm:$0xf]
  %v245 = vld [vmem:[%s3 + $0x14] sm:$0xf]
  %v246 = vld [vmem:[%s3 + $0x18] sm:$0xf]
  %v247 = vld [vmem:[%s3 + $0x1c] sm:$0xf]
  %v248 = vld [vmem:[%s3 + $0x20] sm:$0xf]
  %v249 = vld [vmem:[%s3 + $0x24] sm:$0xf]
  %v250 = vld [vmem:[%s3 + $0x28] sm:$0xf]
  %v251 = vld [vmem:[%s3 + $0x2c] sm:$0xf]
  %v252 = vld [vmem:[%s3 + $0x30] sm:$0xf]
  %v253 = vld [vmem:[%s3 + $0x34] sm:$0xf]
  %v254 = vld [vmem:[%s3 + $0x38] sm:$0xf]
  %v255 = vld [vmem:[%s3 + $0x3c] sm:$0xf]
  %v256 = vld [vmem:[%s3 + $0x40] sm:$0xf]
  %v257 = vld [vmem:[%s3 + $0x44] sm:$0xf]
  %v258 = vld [vmem:[%s3 + $0x48] sm:$0xf]
  %v259 = vld [vmem:[%s3 + $0x4c] sm:$0xf]
  %v260 = vld [vmem:[%s3 + $0x50] sm:$0xf]
  %v261 = vld [vmem:[%s3 + $0x54] sm:$0xf]
  %v262 = vld [vmem:[%s3 + $0x58] sm:$0xf]
  %v263 = vld [vmem:[%s3 + $0x5c] sm:$0xf]
  %v264 = vld [vmem:[%s3 + $0x60] sm:$0xf]
  %v265 = vld [vmem:[%s3 + $0x64] sm:$0xf]
  %v266 = vld [vmem:[%s3 + $0x68] sm:$0xf]
  %v267 = vld [vmem:[%s3 + $0x6c] sm:$0xf]
  %v268 = vld [vmem:[%s3 + $0x70] sm:$0xf]
  %v269 = vld [vmem:[%s3 + $0x74] sm:$0xf]
  %v270 = vld [vmem:[%s3 + $0x78] sm:$0xf]
  %v271 = vld [vmem:[%s3 + $0x7c] sm:$0xf]
  %v272 = vld [vmem:[%s3 + $0x80] sm:$0xf]
  %v273 = vld [vmem:[%s3 + $0x84] sm:$0xf]
  %v274 = vld [vmem:[%s3 + $0x88] sm:$0xf]
  %v275 = vld [vmem:[%s3 + $0x8c] sm:$0xf]
  %v276 = vld [vmem:[%s3 + $0x90] sm:$0xf]
  %v277 = vld [vmem:[%s3 + $0x94] sm:$0xf]
  %v278 = vld [vmem:[%s3 + $0x98] sm:$0xf]
  %v279 = vld [vmem:[%s3 + $0x9c] sm:$0xf]
  %v280 = vld [vmem:[%s3 + $0xa0] sm:$0xf]
  %v281 = vld [vmem:[%s3 + $0xa4] sm:$0xf]
  %v282 = vld [vmem:[%s3 + $0xa8] sm:$0xf]
  %v283 = vld [vmem:[%s3 + $0xac] sm:$0xf]
  %v284 = vld [vmem:[%s3 + $0xb0] sm:$0xf]
  %v285 = vld [vmem:[%s3 + $0xb4] sm:$0xf]
  %v286 = vld [vmem:[%s3 + $0xb8] sm:$0xf]
  %v287 = vld [vmem:[%s3 + $0xbc] sm:$0xf]
  %v288 = vld [vmem:[%s4] sm:$0x1]
  %v290 = vlaneseq
  %v291 = vshrl.u32 %v290, 7
  %v292 = vsub.s32 0, %v291
  %v293 = vrot.slane %v288, %v292
  %v343 = vunpack.c.l.b16 %v240
  %v344 = vunpack.c.l.b16 %v241
  %v345 = vunpack.c.l.b16 %v242
  %v346 = vunpack.c.l.b16 %v243
  %v347 = vunpack.c.l.b16 %v244
  %v348 = vunpack.c.l.b16 %v245
  %v349 = vunpack.c.l.b16 %v246
  %v350 = vunpack.c.l.b16 %v247
  %v351 = vunpack.c.l.b16 %v248
  %v352 = vunpack.c.l.b16 %v249
  %v353 = vunpack.c.l.b16 %v250
  %v354 = vunpack.c.l.b16 %v251
  %v355 = vunpack.c.l.b16 %v252
  %v356 = vunpack.c.l.b16 %v253
  %v357 = vunpack.c.l.b16 %v254
  %v358 = vunpack.c.l.b16 %v255
  %v359 = vunpack.c.l.b16 %v256
  %v360 = vunpack.c.l.b16 %v257
  %v361 = vunpack.c.l.b16 %v258
  %v362 = vunpack.c.l.b16 %v259
  %v363 = vunpack.c.l.b16 %v260
  %v364 = vunpack.c.l.b16 %v261
  %v365 = vunpack.c.l.b16 %v262
  %v366 = vunpack.c.l.b16 %v263
  %v367 = vunpack.c.l.b16 %v264
  %v368 = vunpack.c.l.b16 %v265
  %v369 = vunpack.c.l.b16 %v266
  %v370 = vunpack.c.l.b16 %v267
  %v371 = vunpack.c.l.b16 %v268
  %v372 = vunpack.c.l.b16 %v269
  %v373 = vunpack.c.l.b16 %v270
  %v374 = vunpack.c.l.b16 %v271
  %v375 = vunpack.c.l.b16 %v272
  %v376 = vunpack.c.l.b16 %v273
  %v377 = vunpack.c.l.b16 %v274
  %v378 = vunpack.c.l.b16 %v275
  %v379 = vunpack.c.l.b16 %v276
  %v380 = vunpack.c.l.b16 %v277
  %v381 = vunpack.c.l.b16 %v278
  %v382 = vunpack.c.l.b16 %v279
  %v383 = vunpack.c.l.b16 %v280
  %v384 = vunpack.c.l.b16 %v281
  %v385 = vunpack.c.l.b16 %v282
  %v386 = vunpack.c.l.b16 %v283
  %v387 = vunpack.c.l.b16 %v284
  %v388 = vunpack.c.l.b16 %v285
  %v389 = vunpack.c.l.b16 %v286
  %v390 = vunpack.c.l.b16 %v287
  %v391 = vpack.c.b16 %v344, %v343
  %v392 = vpack.c.b16 %v346, %v345
  %v393 = vpack.c.b16 %v348, %v347
  %v394 = vpack.c.b16 %v350, %v349
  %v395 = vpack.c.b16 %v352, %v351
  %v396 = vpack.c.b16 %v354, %v353
  %v397 = vpack.c.b16 %v356, %v355
  %v398 = vpack.c.b16 %v358, %v357
  %v399 = vpack.c.b16 %v360, %v359
  %v400 = vpack.c.b16 %v362, %v361
  %v401 = vpack.c.b16 %v364, %v363
  %v402 = vpack.c.b16 %v366, %v365
  %v403 = vpack.c.b16 %v368, %v367
  %v404 = vpack.c.b16 %v370, %v369
  %v405 = vpack.c.b16 %v372, %v371
  %v406 = vpack.c.b16 %v374, %v373
  %v407 = vpack.c.b16 %v376, %v375
  %v408 = vpack.c.b16 %v378, %v377
  %v409 = vpack.c.b16 %v380, %v379
  %v410 = vpack.c.b16 %v382, %v381
  %v411 = vpack.c.b16 %v384, %v383
  %v412 = vpack.c.b16 %v386, %v385
  %v413 = vpack.c.b16 %v388, %v387
  %v414 = vpack.c.b16 %v390, %v389
  %439 = vmatprep.subr.bf16.mxu0 0
  %440 = vmatpush1.bf16.msra.mxu0 %v398
  %441 = vmatprep.subr.bf16.mxu0 0
  %442 = vmatpush1.bf16.msra.mxu0 %v397
  %443 = vmatprep.subr.bf16.mxu0 0
  %444 = vmatpush1.bf16.msra.mxu0 %v396
  %445 = vmatprep.subr.bf16.mxu0 0
  %446 = vmatpush1.bf16.msra.mxu0 %v395
  %447 = vmatprep.subr.bf16.mxu0 0
  %448 = vmatpush1.bf16.msra.mxu0 %v394
  %449 = vmatprep.subr.bf16.mxu0 0
  %450 = vmatpush1.bf16.msra.mxu0 %v393
  %451 = vmatprep.subr.bf16.mxu0 0
  %452 = vmatpush1.bf16.msra.mxu0 %v392
  %453 = vmatprep.subr.bf16.mxu0 0
  %454 = vmatpush1.bf16.msra.mxu0 %v391
  %455 = vmatprep.subr.bf16.mxu0 0
  %456 = vmatpush2.bf16.msra.mxu0 %v406
  %457 = vmatprep.subr.bf16.mxu0 0
  %458 = vmatpush2.bf16.msra.mxu0 %v405
  %459 = vmatprep.subr.bf16.mxu0 0
  %460 = vmatpush2.bf16.msra.mxu0 %v404
  %461 = vmatprep.subr.bf16.mxu0 0
  %462 = vmatpush2.bf16.msra.mxu0 %v403
  %463 = vmatprep.subr.bf16.mxu0 0
  %464 = vmatpush2.bf16.msra.mxu0 %v402
  %465 = vmatprep.subr.bf16.mxu0 0
  %466 = vmatpush2.bf16.msra.mxu0 %v401
  %467 = vmatprep.subr.bf16.mxu0 0
  %468 = vmatpush2.bf16.msra.mxu0 %v400
  %469 = vmatprep.subr.bf16.mxu0 0
  %470 = vmatpush2.bf16.msra.mxu0 %v399
  %471 = vmatprep.mubr.bf16.mxu0 %v235
  %472 = vmatmul.mubr.bf16.gmra.mxu0 %v234
  %v473 = vpop.f32.mrf.mxu0
  %v474 = vadd.f32 %v293, %v473
  %v475 = vpop.f32.mrf.mxu0
  %v476 = vpop.f32.mrf.mxu0
  %v477 = vadd.f32 %v293, %v476
  %v478 = vpop.f32.mrf.mxu0
  %479 = vmatprep.mubr.bf16.mxu0 %v238
  %480 = vmatmul.mubr.bf16.gmra.mxu0 %v237
  %v481 = vpop.f32.mrf.mxu0
  %v482 = vadd.f32 %v293, %v481
  %v483 = vpop.f32.mrf.mxu0
  %v484 = vpop.f32.mrf.mxu0
  %v485 = vadd.f32 %v293, %v484
  %v486 = vpop.f32.mrf.mxu0
  %487 = vdwg.mxu0
  %488 = vmatprep.subr.bf16.mxu0 0
  %489 = vmatpush1.bf16.msra.mxu0 %v414
  %490 = vmatprep.subr.bf16.mxu0 0
  %491 = vmatpush1.bf16.msra.mxu0 %v413
  %492 = vmatprep.subr.bf16.mxu0 0
  %493 = vmatpush1.bf16.msra.mxu0 %v412
  %494 = vmatprep.subr.bf16.mxu0 0
  %495 = vmatpush1.bf16.msra.mxu0 %v411
  %496 = vmatprep.subr.bf16.mxu0 0
  %497 = vmatpush1.bf16.msra.mxu0 %v410
  %498 = vmatprep.subr.bf16.mxu0 0
  %499 = vmatpush1.bf16.msra.mxu0 %v409
  %500 = vmatprep.subr.bf16.mxu0 0
  %501 = vmatpush1.bf16.msra.mxu0 %v408
  %502 = vmatprep.subr.bf16.mxu0 0
  %503 = vmatpush1.bf16.msra.mxu0 %v407
  %504 = vmatprep.subr.bf16.mxu0 0
  %505 = vmatpush2.bf16.msra.mxu0 0
  %506 = vmatprep.subr.bf16.mxu0 0
  %507 = vmatpush2.bf16.msra.mxu0 0
  %508 = vmatprep.subr.bf16.mxu0 0
  %509 = vmatpush2.bf16.msra.mxu0 0
  %510 = vmatprep.subr.bf16.mxu0 0
  %511 = vmatpush2.bf16.msra.mxu0 0
  %512 = vmatprep.subr.bf16.mxu0 0
  %513 = vmatpush2.bf16.msra.mxu0 0
  %514 = vmatprep.subr.bf16.mxu0 0
  %515 = vmatpush2.bf16.msra.mxu0 0
  %516 = vmatprep.subr.bf16.mxu0 0
  %517 = vmatpush2.bf16.msra.mxu0 0
  %518 = vmatprep.subr.bf16.mxu0 0
  %519 = vmatpush2.bf16.msra.mxu0 0
  %520 = vmatprep.mubr.bf16.mxu0 0
  %521 = vmatmul.mubr.bf16.gmra.mxu0 %v236
  %v522 = vpop.f32.mrf.mxu0
  %v523 = vadd.f32 %v474, %v522
  %v524 = vpop.f32.mrf.mxu0
  %v525 = vpop.f32.mrf.mxu0
  %v526 = vadd.f32 %v477, %v525
  %v527 = vpop.f32.mrf.mxu0
  %528 = vmatprep.mubr.bf16.mxu0 0
  %529 = vmatmul.mubr.bf16.gmra.mxu0 %v239
  %v530 = vpop.f32.mrf.mxu0
  %v531 = vadd.f32 %v482, %v530
  %v532 = vpop.f32.mrf.mxu0
  %v533 = vpop.f32.mrf.mxu0
  %v534 = vadd.f32 %v485, %v533
  %v535 = vpop.f32.mrf.mxu0
  %536 = vdwg.mxu0
  %v537 = vadd.f32 %v523, %v526
  %v538 = vadd.f32 %v537, %v531
  %v539 = vadd.f32 %v538, %v534
  %v540 = vrot.slane %v539, 4
  %v541 = vadd.f32 %v539, %v540
  %v542 = vrot.slane %v541, 2
  %v543 = vadd.f32 %v541, %v542
  %v544 = vrot.slane %v543, 1
  %v545 = vadd.f32 %v543, %v544
  %546 = vrot.lane.b32.xlu0 %v545, 8
  %v547 = vpop.permute.xlu0 %546
  %v548 = vadd.f32 %v545, %v547
  %549 = vrot.lane.b32.xlu0 %v548, 16
  %v550 = vpop.permute.xlu0 %549
  %v551 = vadd.f32 %v548, %v550
  %552 = vrot.lane.b32.xlu0 %v551, 32
  %v553 = vpop.permute.xlu0 %552
  %v554 = vadd.f32 %v551, %v553
  %555 = vrot.lane.b32.xlu0 %v554, 64
  %v556 = vpop.permute.xlu0 %555
  %v557 = vadd.f32 %v554, %v556
  %v558 = vmul.f32 %v557, 0.001953125
  %v559 = vmul.f32 %v523, %v523
  %v560 = vmul.f32 %v526, %v526
  %v561 = vmul.f32 %v531, %v531
  %v562 = vmul.f32 %v534, %v534
  %v563 = vadd.f32 %v559, %v560
  %v564 = vadd.f32 %v563, %v561
  %v565 = vadd.f32 %v564, %v562
  %v566 = vrot.slane %v565, 4
  %v567 = vadd.f32 %v565, %v566
  %v568 = vrot.slane %v567, 2
  %v569 = vadd.f32 %v567, %v568
  %v570 = vrot.slane %v569, 1
  %v571 = vadd.f32 %v569, %v570
  %572 = vrot.lane.b32.xlu0 %v571, 8
  %v573 = vpop.permute.xlu0 %572
  %v574 = vadd.f32 %v571, %v573
  %575 = vrot.lane.b32.xlu0 %v574, 16
  %v576 = vpop.permute.xlu0 %575
  %v577 = vadd.f32 %v574, %v576
  %578 = vrot.lane.b32.xlu0 %v577, 32
  %v579 = vpop.permute.xlu0 %578
  %v580 = vadd.f32 %v577, %v579
  %581 = vrot.lane.b32.xlu0 %v580, 64
  %v582 = vpop.permute.xlu0 %581
  %v583 = vadd.f32 %v580, %v582
  %v584 = vmul.f32 %v583, 0.001953125
  %v585 = vmul.f32 %v558, %v558
  %v586 = vsub.f32 %v584, %v585
  %v587 = vmax.f32 %v586, 0.0
  %v588 = vld [vmem:[%s5] sm:$0x1]
  %v589 = vadd.f32 %v587, 1e-05
  %v590 = vrsqrt.pop %v589
  %v591 = vmul.f32 %v588, %v590
  %v592 = vld [vmem:[%s6] sm:$0x1]
  %v593 = vmul.f32 %v558, %v591
  %v594 = vsub.f32 %v592, %v593
  %v596 = vlaneseq
  %v597 = vshrl.u32 %v596, 7
  %v598 = vsub.s32 0, %v597
  %v599 = vrot.slane %v591, %v598
  %v601 = vmul.f32 %v523, %v599
  %v602 = vmul.f32 %v526, %v599
  %v603 = vmul.f32 %v531, %v599
  %v604 = vmul.f32 %v534, %v599
  %v606 = vlaneseq
  %v607 = vshrl.u32 %v606, 7
  %v608 = vsub.s32 0, %v607
  %v609 = vrot.slane %v594, %v608
  %v611 = vadd.f32 %v601, %v609
  %v612 = vadd.f32 %v602, %v609
  %v613 = vadd.f32 %v603, %v609
  %v614 = vadd.f32 %v604, %v609
  %v615 = vmax.f32 %v611, 0.0
  %v616 = vmax.f32 %v612, 0.0
  %v617 = vmax.f32 %v613, 0.0
  %v618 = vmax.f32 %v614, 0.0
  %v623 = vrot.slane %v615, 7
  %v624 = vrot.slane %v616, 7
  %v625 = vsel %vm200, %v623, %v624
  %v626 = vrot.slane %v617, 7
  %v627 = vsel %vm200, %v624, %v626
  %v628 = vrot.slane %v618, 7
  %v629 = vsel %vm200, %v626, %v628
  %v634 = vsel %vm200, 0.0, %v623
  %v635 = vmul.f32 %v98, %v634
  %v636 = vmul.f32 %v99, %v625
  %v637 = vmul.f32 %v100, %v627
  %v638 = vmul.f32 %v101, %v629
  %v639 = vrot.slane %v615, 1
  %v640 = vrot.slane %v616, 1
  %v641 = vsel %vm217, %v639, %v640
  %v642 = vrot.slane %v617, 1
  %v643 = vsel %vm217, %v640, %v642
  %v644 = vrot.slane %v618, 1
  %v645 = vsel %vm217, %v642, %v644
  %v650 = vsel %vm217, %v644, 0.0
  %v651 = vmul.f32 %v110, %v641
  %v652 = vmul.f32 %v111, %v643
  %v653 = vmul.f32 %v112, %v645
  %v654 = vmul.f32 %v113, %v650
  %v655 = vpack.c.bf16 %v636, %v635
  %v656 = vpack.c.bf16 %v616, %v615
  %v657 = vpack.c.bf16 %v652, %v651
  %v658 = vpack.c.bf16 %v638, %v637
  %v659 = vpack.c.bf16 %v618, %v617
  %v660 = vpack.c.bf16 %v654, %v653
  %v661 = vld [vmem:[%s7] sm:$0xf]
  %v662 = vld [vmem:[%s7 + $0x4] sm:$0xf]
  %v663 = vld [vmem:[%s7 + $0x8] sm:$0xf]
  %v664 = vld [vmem:[%s7 + $0xc] sm:$0xf]
  %v665 = vld [vmem:[%s7 + $0x10] sm:$0xf]
  %v666 = vld [vmem:[%s7 + $0x14] sm:$0xf]
  %v667 = vld [vmem:[%s7 + $0x18] sm:$0xf]
  %v668 = vld [vmem:[%s7 + $0x1c] sm:$0xf]
  %v669 = vld [vmem:[%s7 + $0x20] sm:$0xf]
  %v670 = vld [vmem:[%s7 + $0x24] sm:$0xf]
  %v671 = vld [vmem:[%s7 + $0x28] sm:$0xf]
  %v672 = vld [vmem:[%s7 + $0x2c] sm:$0xf]
  %v673 = vld [vmem:[%s7 + $0x30] sm:$0xf]
  %v674 = vld [vmem:[%s7 + $0x34] sm:$0xf]
  %v675 = vld [vmem:[%s7 + $0x38] sm:$0xf]
  %v676 = vld [vmem:[%s7 + $0x3c] sm:$0xf]
  %v677 = vld [vmem:[%s7 + $0x40] sm:$0xf]
  %v678 = vld [vmem:[%s7 + $0x44] sm:$0xf]
  %v679 = vld [vmem:[%s7 + $0x48] sm:$0xf]
  %v680 = vld [vmem:[%s7 + $0x4c] sm:$0xf]
  %v681 = vld [vmem:[%s7 + $0x50] sm:$0xf]
  %v682 = vld [vmem:[%s7 + $0x54] sm:$0xf]
  %v683 = vld [vmem:[%s7 + $0x58] sm:$0xf]
  %v684 = vld [vmem:[%s7 + $0x5c] sm:$0xf]
  %v685 = vld [vmem:[%s7 + $0x60] sm:$0xf]
  %v686 = vld [vmem:[%s7 + $0x64] sm:$0xf]
  %v687 = vld [vmem:[%s7 + $0x68] sm:$0xf]
  %v688 = vld [vmem:[%s7 + $0x6c] sm:$0xf]
  %v689 = vld [vmem:[%s7 + $0x70] sm:$0xf]
  %v690 = vld [vmem:[%s7 + $0x74] sm:$0xf]
  %v691 = vld [vmem:[%s7 + $0x78] sm:$0xf]
  %v692 = vld [vmem:[%s7 + $0x7c] sm:$0xf]
  %v693 = vld [vmem:[%s7 + $0x80] sm:$0xf]
  %v694 = vld [vmem:[%s7 + $0x84] sm:$0xf]
  %v695 = vld [vmem:[%s7 + $0x88] sm:$0xf]
  %v696 = vld [vmem:[%s7 + $0x8c] sm:$0xf]
  %v697 = vld [vmem:[%s7 + $0x90] sm:$0xf]
  %v698 = vld [vmem:[%s7 + $0x94] sm:$0xf]
  %v699 = vld [vmem:[%s7 + $0x98] sm:$0xf]
  %v700 = vld [vmem:[%s7 + $0x9c] sm:$0xf]
  %v701 = vld [vmem:[%s7 + $0xa0] sm:$0xf]
  %v702 = vld [vmem:[%s7 + $0xa4] sm:$0xf]
  %v703 = vld [vmem:[%s7 + $0xa8] sm:$0xf]
  %v704 = vld [vmem:[%s7 + $0xac] sm:$0xf]
  %v705 = vld [vmem:[%s7 + $0xb0] sm:$0xf]
  %v706 = vld [vmem:[%s7 + $0xb4] sm:$0xf]
  %v707 = vld [vmem:[%s7 + $0xb8] sm:$0xf]
  %v708 = vld [vmem:[%s7 + $0xbc] sm:$0xf]
  %v709 = vld [vmem:[%s8] sm:$0x1]
  %v711 = vlaneseq
  %v712 = vshrl.u32 %v711, 7
  %v713 = vsub.s32 0, %v712
  %v714 = vrot.slane %v709, %v713
  %v764 = vunpack.c.l.b16 %v661
  %v765 = vunpack.c.l.b16 %v662
  %v766 = vunpack.c.l.b16 %v663
  %v767 = vunpack.c.l.b16 %v664
  %v768 = vunpack.c.l.b16 %v665
  %v769 = vunpack.c.l.b16 %v666
  %v770 = vunpack.c.l.b16 %v667
  %v771 = vunpack.c.l.b16 %v668
  %v772 = vunpack.c.l.b16 %v669
  %v773 = vunpack.c.l.b16 %v670
  %v774 = vunpack.c.l.b16 %v671
  %v775 = vunpack.c.l.b16 %v672
  %v776 = vunpack.c.l.b16 %v673
  %v777 = vunpack.c.l.b16 %v674
  %v778 = vunpack.c.l.b16 %v675
  %v779 = vunpack.c.l.b16 %v676
  %v780 = vunpack.c.l.b16 %v677
  %v781 = vunpack.c.l.b16 %v678
  %v782 = vunpack.c.l.b16 %v679
  %v783 = vunpack.c.l.b16 %v680
  %v784 = vunpack.c.l.b16 %v681
  %v785 = vunpack.c.l.b16 %v682
  %v786 = vunpack.c.l.b16 %v683
  %v787 = vunpack.c.l.b16 %v684
  %v788 = vunpack.c.l.b16 %v685
  %v789 = vunpack.c.l.b16 %v686
  %v790 = vunpack.c.l.b16 %v687
  %v791 = vunpack.c.l.b16 %v688
  %v792 = vunpack.c.l.b16 %v689
  %v793 = vunpack.c.l.b16 %v690
  %v794 = vunpack.c.l.b16 %v691
  %v795 = vunpack.c.l.b16 %v692
  %v796 = vunpack.c.l.b16 %v693
  %v797 = vunpack.c.l.b16 %v694
  %v798 = vunpack.c.l.b16 %v695
  %v799 = vunpack.c.l.b16 %v696
  %v800 = vunpack.c.l.b16 %v697
  %v801 = vunpack.c.l.b16 %v698
  %v802 = vunpack.c.l.b16 %v699
  %v803 = vunpack.c.l.b16 %v700
  %v804 = vunpack.c.l.b16 %v701
  %v805 = vunpack.c.l.b16 %v702
  %v806 = vunpack.c.l.b16 %v703
  %v807 = vunpack.c.l.b16 %v704
  %v808 = vunpack.c.l.b16 %v705
  %v809 = vunpack.c.l.b16 %v706
  %v810 = vunpack.c.l.b16 %v707
  %v811 = vunpack.c.l.b16 %v708
  %v812 = vpack.c.b16 %v765, %v764
  %v813 = vpack.c.b16 %v767, %v766
  %v814 = vpack.c.b16 %v769, %v768
  %v815 = vpack.c.b16 %v771, %v770
  %v816 = vpack.c.b16 %v773, %v772
  %v817 = vpack.c.b16 %v775, %v774
  %v818 = vpack.c.b16 %v777, %v776
  %v819 = vpack.c.b16 %v779, %v778
  %v820 = vpack.c.b16 %v781, %v780
  %v821 = vpack.c.b16 %v783, %v782
  %v822 = vpack.c.b16 %v785, %v784
  %v823 = vpack.c.b16 %v787, %v786
  %v824 = vpack.c.b16 %v789, %v788
  %v825 = vpack.c.b16 %v791, %v790
  %v826 = vpack.c.b16 %v793, %v792
  %v827 = vpack.c.b16 %v795, %v794
  %v828 = vpack.c.b16 %v797, %v796
  %v829 = vpack.c.b16 %v799, %v798
  %v830 = vpack.c.b16 %v801, %v800
  %v831 = vpack.c.b16 %v803, %v802
  %v832 = vpack.c.b16 %v805, %v804
  %v833 = vpack.c.b16 %v807, %v806
  %v834 = vpack.c.b16 %v809, %v808
  %v835 = vpack.c.b16 %v811, %v810
  %860 = vmatprep.subr.bf16.mxu0 0
  %861 = vmatpush1.bf16.msra.mxu0 %v819
  %862 = vmatprep.subr.bf16.mxu0 0
  %863 = vmatpush1.bf16.msra.mxu0 %v818
  %864 = vmatprep.subr.bf16.mxu0 0
  %865 = vmatpush1.bf16.msra.mxu0 %v817
  %866 = vmatprep.subr.bf16.mxu0 0
  %867 = vmatpush1.bf16.msra.mxu0 %v816
  %868 = vmatprep.subr.bf16.mxu0 0
  %869 = vmatpush1.bf16.msra.mxu0 %v815
  %870 = vmatprep.subr.bf16.mxu0 0
  %871 = vmatpush1.bf16.msra.mxu0 %v814
  %872 = vmatprep.subr.bf16.mxu0 0
  %873 = vmatpush1.bf16.msra.mxu0 %v813
  %874 = vmatprep.subr.bf16.mxu0 0
  %875 = vmatpush1.bf16.msra.mxu0 %v812
  %876 = vmatprep.subr.bf16.mxu0 0
  %877 = vmatpush2.bf16.msra.mxu0 %v827
  %878 = vmatprep.subr.bf16.mxu0 0
  %879 = vmatpush2.bf16.msra.mxu0 %v826
  %880 = vmatprep.subr.bf16.mxu0 0
  %881 = vmatpush2.bf16.msra.mxu0 %v825
  %882 = vmatprep.subr.bf16.mxu0 0
  %883 = vmatpush2.bf16.msra.mxu0 %v824
  %884 = vmatprep.subr.bf16.mxu0 0
  %885 = vmatpush2.bf16.msra.mxu0 %v823
  %886 = vmatprep.subr.bf16.mxu0 0
  %887 = vmatpush2.bf16.msra.mxu0 %v822
  %888 = vmatprep.subr.bf16.mxu0 0
  %889 = vmatpush2.bf16.msra.mxu0 %v821
  %890 = vmatprep.subr.bf16.mxu0 0
  %891 = vmatpush2.bf16.msra.mxu0 %v820
  %892 = vmatprep.mubr.bf16.mxu0 %v656
  %893 = vmatmul.mubr.bf16.gmra.mxu0 %v655
  %v894 = vpop.f32.mrf.mxu0
  %v895 = vadd.f32 %v714, %v894
  %v896 = vpop.f32.mrf.mxu0
  %v897 = vpop.f32.mrf.mxu0
  %v898 = vadd.f32 %v714, %v897
  %v899 = vpop.f32.mrf.mxu0
  %900 = vmatprep.mubr.bf16.mxu0 %v659
  %901 = vmatmul.mubr.bf16.gmra.mxu0 %v658
  %v902 = vpop.f32.mrf.mxu0
  %v903 = vadd.f32 %v714, %v902
  %v904 = vpop.f32.mrf.mxu0
  %v905 = vpop.f32.mrf.mxu0
  %v906 = vadd.f32 %v714, %v905
  %v907 = vpop.f32.mrf.mxu0
  %908 = vdwg.mxu0
  %909 = vmatprep.subr.bf16.mxu0 0
  %910 = vmatpush1.bf16.msra.mxu0 %v835
  %911 = vmatprep.subr.bf16.mxu0 0
  %912 = vmatpush1.bf16.msra.mxu0 %v834
  %913 = vmatprep.subr.bf16.mxu0 0
  %914 = vmatpush1.bf16.msra.mxu0 %v833
  %915 = vmatprep.subr.bf16.mxu0 0
  %916 = vmatpush1.bf16.msra.mxu0 %v832
  %917 = vmatprep.subr.bf16.mxu0 0
  %918 = vmatpush1.bf16.msra.mxu0 %v831
  %919 = vmatprep.subr.bf16.mxu0 0
  %920 = vmatpush1.bf16.msra.mxu0 %v830
  %921 = vmatprep.subr.bf16.mxu0 0
  %922 = vmatpush1.bf16.msra.mxu0 %v829
  %923 = vmatprep.subr.bf16.mxu0 0
  %924 = vmatpush1.bf16.msra.mxu0 %v828
  %925 = vmatprep.subr.bf16.mxu0 0
  %926 = vmatpush2.bf16.msra.mxu0 0
  %927 = vmatprep.subr.bf16.mxu0 0
  %928 = vmatpush2.bf16.msra.mxu0 0
  %929 = vmatprep.subr.bf16.mxu0 0
  %930 = vmatpush2.bf16.msra.mxu0 0
  %931 = vmatprep.subr.bf16.mxu0 0
  %932 = vmatpush2.bf16.msra.mxu0 0
  %933 = vmatprep.subr.bf16.mxu0 0
  %934 = vmatpush2.bf16.msra.mxu0 0
  %935 = vmatprep.subr.bf16.mxu0 0
  %936 = vmatpush2.bf16.msra.mxu0 0
  %937 = vmatprep.subr.bf16.mxu0 0
  %938 = vmatpush2.bf16.msra.mxu0 0
  %939 = vmatprep.subr.bf16.mxu0 0
  %940 = vmatpush2.bf16.msra.mxu0 0
  %941 = vmatprep.mubr.bf16.mxu0 0
  %942 = vmatmul.mubr.bf16.gmra.mxu0 %v657
  %v943 = vpop.f32.mrf.mxu0
  %v944 = vadd.f32 %v895, %v943
  %v945 = vpop.f32.mrf.mxu0
  %v946 = vpop.f32.mrf.mxu0
  %v947 = vadd.f32 %v898, %v946
  %v948 = vpop.f32.mrf.mxu0
  %949 = vmatprep.mubr.bf16.mxu0 0
  %950 = vmatmul.mubr.bf16.gmra.mxu0 %v660
  %v951 = vpop.f32.mrf.mxu0
  %v952 = vadd.f32 %v903, %v951
  %v953 = vpop.f32.mrf.mxu0
  %v954 = vpop.f32.mrf.mxu0
  %v955 = vadd.f32 %v906, %v954
  %v956 = vpop.f32.mrf.mxu0
  %957 = vdwg.mxu0
  %v958 = vadd.f32 %v33, %v944
  %v959 = vadd.f32 %v34, %v947
  %v960 = vadd.f32 %v35, %v952
  %v961 = vadd.f32 %v36, %v955
  %962 = vst [vmem:[%s9] sm:$0xff] %v958
  %963 = vst [vmem:[%s9 + $0x8] sm:$0xff] %v959
  %964 = vst [vmem:[%s9 + $0x10] sm:$0xff] %v960
  %965 = vst [vmem:[%s9 + $0x18] sm:$0xff] %v961
  // Predicated region
  $region38: #{resblock_pallas.1} parent=0 // pred_check
    _
  $region39: #{resblock_pallas.1} parent=0 // pred_check_branch
    %967 = sbr.rel (0) target = $region41
  $region40: #{resblock_pallas.1} parent=0 // pred_region
    _
  $region41: #{resblock_pallas.1} parent=0 // pred_fallthru
    _
  // Predicated region
  $region42: #{resblock_pallas.1} parent=0 // pred_check
    _
  $region43: #{resblock_pallas.1} parent=0 // pred_check_branch
    %969 = sbr.rel (0) target = $region45
  $region44: #{resblock_pallas.1} parent=0 // pred_region
    _
  $region45: #{resblock_pallas.1} parent=0 // pred_fallthru
    _

</llo_original>
